<compile_context>
chip_gen: v7x
topology: tpu7x:2x2x1
jax: 0.10.0
libtpu: 0.0.40
codegen_flags: <defaults>
</compile_context>

<pallas_src>
import functools
import math

import jax
import jax.numpy as jnp
from jax import lax
from jax.experimental import pallas as pl
from jax.experimental.pallas import tpu as pltpu

BN_EPS = 1e-5                 # torch BatchNorm1d default eps
DEFAULT_BLOCK_B1 = 8192       # kernel-1 batch rows per grid step (x tile = 1 MiB @ F=32)
DEFAULT_BLOCK_B2 = 256        # kernel-2 query tile / key chunk (VMEM-safe on v5e/v7x)
NEG_INF = -1e30               # additive mask for padded keys (finite: no inf-inf NaNs)
VMEM_LIMIT = 32 * 1024 * 1024


def _round_up(n, m):
    return ((n + m - 1) // m) * m


def _resident(a):
    """Full-array block with a constant index map: stays VMEM-resident."""
    return pl.BlockSpec(a.shape, lambda *_: (0, 0))


# --------------------------------------------------------------------------- #
# Kernel 1: x tile -> transposed out_vec tile (BatchNorm1d(H2) pre-folded)
# --------------------------------------------------------------------------- #
def vec_mlp_kernel(x_ref, w1_ref, b1_ref, w2t_ref, b2_ref, ov_ref):
    """ov tile (H2, TB1) = fold_BN(Linear2(ReLU(Linear1(x_tile))))^T."""
    x = x_ref[...]                                                    # (TB1, F)
    h1 = jnp.dot(x, w1_ref[...], preferred_element_type=jnp.float32) + b1_ref[...]
    h1 = jnp.maximum(h1, 0.0)                         # Dropout(eval)=id, ReLU
    # (H2, H) x (TB1, H) contracted on H -> (H2, TB1): lane-dense output block.
    v_t = lax.dot_general(w2t_ref[...], h1, (((1,), (1,)), ((), ())),
                          preferred_element_type=jnp.float32)
    ov_ref[...] = (v_t + b2_ref[...]).astype(ov_ref.dtype)            # + (H2,1) bias col


# --------------------------------------------------------------------------- #
# Kernel 2: flash-style softmax self-grouping + prediction head
#   grid = (query tiles, key chunks); online softmax state in VMEM scratch.
#   Everything stays lane-dense along the query axis: scores are (KC, TB),
#   running stats are (1, TB) rows and the output block is (1, TB).
# --------------------------------------------------------------------------- #
def attn_pred_kernel(q_ref, krow_ref, kcol_ref, bias_ref, w3_ref, b3_ref,
                     o_ref, m_sc, l_sc, acc_sc, *, masked):
    c = pl.program_id(1)

    @pl.when(c == 0)
    def _():
        m_sc[...] = jnp.full_like(m_sc, -jnp.inf)
        l_sc[...] = jnp.zeros_like(l_sc)
        acc_sc[...] = jnp.zeros_like(acc_sc)

    # scores: (KC, H2) x (H2, TB) -> (KC, TB)   (plain matmul, K = H2 = 8)
    s = lax.dot_general(krow_ref[...], q_ref[...], (((1,), (0,)), ((), ())),
                        preferred_element_type=jnp.float32)
    if masked:                                   # static flag: skip when no key padding
        s = s + bias_ref[...]                    # (KC, 1) additive 0 / -1e30 bias

    m_prev = m_sc[...]                                                # (1, TB)
    m_new = jnp.maximum(m_prev, jnp.max(s, axis=0, keepdims=True))
    alpha = jnp.exp(m_prev - m_new)                                   # (1, TB)
    p = jnp.exp(s - m_new)                                            # (KC, TB)  (EUP)
    l_sc[...] = alpha * l_sc[...] + jnp.sum(p, axis=0, keepdims=True)
    # values: (H2, KC) x (KC, TB) -> (H2, TB)   (plain matmul)
    acc_sc[...] = alpha * acc_sc[...] + lax.dot_general(
        kcol_ref[...], p, (((1,), (0,)), ((), ())),
        preferred_element_type=jnp.float32)
    m_sc[...] = m_new

    @pl.when(c == pl.num_programs(1) - 1)
    def _():
        # TODO(synk): pl.reciprocal(..., approx=True) is a free EUP win but is
        # marginal against the 1e-4 parity check, so the exact form is kept.
        g = jnp.maximum(acc_sc[...] * pl.reciprocal(l_sc[...]), 0.0)  # (H2, TB)
        out = jnp.sum(g * w3_ref[...], axis=0, keepdims=True) + b3_ref[...]
        o_ref[...] = out.astype(o_ref.dtype)                          # (1, TB)


# --------------------------------------------------------------------------- #
# Wrapper
# --------------------------------------------------------------------------- #
def group_net_forward(x, params, block_b1=None, block_b2=None):
    """Eval-mode forward of group_net via two batch-tiled pallas_calls."""
    w1, b1, w2, b2, w3, b3, bnh, bn1 = params
    B, F = x.shape
    H2 = w2.shape[1]

    # --- Fold eval-mode BatchNorms into the adjacent linears (exact algebra). ---
    mh, vh, gh, bh = bnh
    sh = gh / jnp.sqrt(vh + BN_EPS)                        # (H2,)
    w2t_eff = (w2 * sh[None, :]).T                         # (H2, H)
    b2_col = ((b2[0] - mh) * sh + bh).reshape(H2, 1)       # (H2, 1)
    m1, v1, g1, be1 = bn1                                  # each (1,)
    s1 = g1 / jnp.sqrt(v1 + BN_EPS)
    w3_col = (w3[0] * s1[0]).reshape(H2, 1)                # (H2, 1); torch w3 is (1, H2)
    b3_eff = ((b3[0, 0] - m1[0]) * s1[0] + be1[0]).reshape(1, 1)

    # ---------------- Kernel 1: x -> out_vec^T (HBM-bound, big batch tiles) ----------
    tb1 = block_b1 if block_b1 is not None else min(DEFAULT_BLOCK_B1, _round_up(B, 128))
    assert tb1 % 128 == 0, "block_b1 must be a multiple of 128 (lane-dense out tile)"
    bp1 = _round_up(B, tb1)
    xp = jnp.pad(x, ((0, bp1 - B), (0, 0))) if bp1 != B else x

    out_vec_t = pl.pallas_call(
        vec_mlp_kernel,
        out_shape=jax.ShapeDtypeStruct((H2, bp1), jnp.float32),
        grid=(bp1 // tb1,),
        in_specs=[pl.BlockSpec((tb1, F), lambda i: (i, 0)),
                  _resident(w1), _resident(b1), _resident(w2t_eff), _resident(b2_col)],
        out_specs=pl.BlockSpec((H2, tb1), lambda i: (0, i)),
        compiler_params=pltpu.CompilerParams(
            dimension_semantics=("parallel",), vmem_limit_bytes=VMEM_LIMIT),
    )(xp, w1, b1, w2t_eff, b2_col)

    # ---------------- Kernel 2: softmax grouping + prediction head -------------------
    tb2 = block_b2 if block_b2 is not None else min(DEFAULT_BLOCK_B2, _round_up(B, 128))
    assert tb2 % 128 == 0, "block_b2 must be a multiple of 128"
    kc2 = tb2                               # key-chunk width (same padding granule)
    bp2 = _round_up(B, tb2)                 # key padding decoupled from kernel-1 tiles
    if bp2 <= bp1:
        kv_t = out_vec_t[:, :bp2]           # (H2, bp2) column layout (values / queries)
    else:
        kv_t = jnp.pad(out_vec_t, ((0, 0), (0, bp2 - bp1)))
    kv_rows = kv_t.T                        # (bp2, H2) row layout (keys) — tiny
    masked = bp2 > B                        # padded out_vec rows are garbage: mask them
    key_bias = jnp.where(jnp.arange(bp2)[:, None] < B, 0.0, NEG_INF).astype(jnp.float32)

    out_row = pl.pallas_call(
        functools.partial(attn_pred_kernel, masked=masked),
        out_shape=jax.ShapeDtypeStruct((1, bp2), jnp.float32),
        grid=(bp2 // tb2, bp2 // kc2),
        in_specs=[pl.BlockSpec((H2, tb2), lambda i, c: (0, i)),    # q tile (cols)
                  pl.BlockSpec((kc2, H2), lambda i, c: (c, 0)),    # key chunk (rows)
                  pl.BlockSpec((H2, kc2), lambda i, c: (0, c)),    # value chunk (cols)
                  pl.BlockSpec((kc2, 1), lambda i, c: (c, 0)),     # key mask bias
                  _resident(w3_col), _resident(b3_eff)],
        out_specs=pl.BlockSpec((1, tb2), lambda i, c: (0, i)),
        scratch_shapes=[pltpu.VMEM((1, tb2), jnp.float32),         # running max
                        pltpu.VMEM((1, tb2), jnp.float32),         # running denom
                        pltpu.VMEM((H2, tb2), jnp.float32)],       # running acc
        compiler_params=pltpu.CompilerParams(
            dimension_semantics=("parallel", "arbitrary"),
            vmem_limit_bytes=VMEM_LIMIT),
    )(kv_t, kv_rows, kv_t, key_bias, w3_col, b3_eff)

    return out_row[0, :B].reshape(B, 1)


# --------------------------------------------------------------------------- #
# Parameters + pure-JAX reference
# --------------------------------------------------------------------------- #
def init_params(key, num_feature, hidden_size=64):
    """Deterministic torch-style init; linear weights stored as (in, out)."""
    hidden_2 = int(math.sqrt(hidden_size))   # int(np.sqrt(64)) == 8
    ks = jax.random.split(key, 10)

    def linear(kw, kb, fan_in, fan_out):
        bound = 1.0 / math.sqrt(fan_in)
        w = jax.random.uniform(kw, (fan_in, fan_out), jnp.float32, -bound, bound)
        b = jax.random.uniform(kb, (1, fan_out), jnp.float32, -bound, bound)
        return w, b

    w1, b1 = linear(ks[0], ks[1], num_feature, hidden_size)   # (F,H), (1,H)
    w2, b2 = linear(ks[2], ks[3], hidden_size, hidden_2)      # (H,H2), (1,H2)
    w3_io, b3 = linear(ks[4], ks[5], hidden_2, 1)             # (H2,1), (1,1)
    w3 = w3_io.T                                              # (1,H2) torch (out,in) row

    # Non-trivial "running stats" so the BN folds are genuinely exercised.
    bnh = (0.1 * jax.random.normal(ks[6], (hidden_2,), jnp.float32),        # mean
           jax.random.uniform(ks[7], (hidden_2,), jnp.float32, 0.5, 1.5),   # var
           jax.random.uniform(ks[8], (hidden_2,), jnp.float32, 0.8, 1.2),   # gamma
           0.1 * jax.random.normal(ks[9], (hidden_2,), jnp.float32))        # beta
    bn1 = (jnp.array([0.05], jnp.float32), jnp.array([1.2], jnp.float32),
           jnp.array([0.9], jnp.float32), jnp.array([-0.1], jnp.float32))
    return (w1, b1, w2, b2, w3, b3, bnh, bn1)


def reference_forward(x, params):
    """Pure-JAX mirror of the eval-mode torch forward (no folding)."""
    w1, b1, w2, b2, w3, b3, bnh, bn1 = params
    dot = functools.partial(jnp.dot, precision=lax.Precision.HIGHEST)
    h1 = jnp.maximum(dot(x, w1) + b1, 0.0)
    v = dot(h1, w2) + b2
    mh, vh, gh, bh = bnh
    v = (v - mh) / jnp.sqrt(vh + BN_EPS) * gh + bh            # BatchNorm1d(H2), eval
    p = jax.nn.softmax(dot(v, v.T), axis=-1)
    g = jnp.maximum(dot(p, v), 0.0)                           # Dropout(eval)=id, ReLU
    out = dot(g, w3.T) + b3                                   # Linear(H2 -> 1)
    m1, v1, g1, be1 = bn1
    return (out - m1) / jnp.sqrt(v1 + BN_EPS) * g1 + be1      # BatchNorm1d(1), eval


if __name__ == "__main__":
    F, H = 32, 64   # num_feature=32, hidden_size=64 -> hidden_2=8
    key = jax.random.PRNGKey(0)
    kx1, kx2, kp = jax.random.split(key, 3)
    params = init_params(kp, F, hidden_size=H)

    # Config 1: defaults, single-tile grids (B=16 padded to 128; keys masked).
    x1 = jax.random.normal(kx1, (16, F), jnp.float32)
    y1 = jax.block_until_ready(group_net_forward(x1, params))
    assert y1.shape == (16, 1), y1.shape
    assert jnp.allclose(y1, reference_forward(x1, params), atol=1e-4, rtol=1e-4)

    # Config 2: multi-step grids + multi-chunk online softmax + key masking
    # (B=200, tb1=tb2=128 -> bp=256, kernel-1 grid (2,), kernel-2 grid (2,2)).
    x2 = jax.random.normal(kx2, (200, F), jnp.float32)
    y2 = jax.block_until_ready(group_net_forward(x2, params, block_b1=128, block_b2=128))
    assert y2.shape == (200, 1), y2.shape
    assert jnp.allclose(y2, reference_forward(x2, params), atol=1e-4, rtol=1e-4)

    print("KERNEL_OK")
</pallas_src>

<mosaic_0001>
module attributes {stable_mosaic.version = 11 : i64} {
  func.func @vec_mlp_kernel(%arg0: i32, %arg1: memref<128x32xf32, #tpu.memory_space<vmem>>, %arg2: memref<32x64xf32, #tpu.memory_space<vmem>>, %arg3: memref<1x64xf32, #tpu.memory_space<vmem>>, %arg4: memref<8x64xf32, #tpu.memory_space<vmem>>, %arg5: memref<8x1xf32, #tpu.memory_space<vmem>>, %arg6: memref<8x128xf32, #tpu.memory_space<vmem>>) attributes {dimension_semantics = [#tpu.dimension_semantics<parallel>], iteration_bounds = array<i64: 1>, scalar_prefetch = 0 : i64, scratch_operands = 0 : i64, tpu.core_type = #tpu.core_type<tc>, window_params = [{transform_indices = @transform_0, window_bounds = array<i64: 128, 32>}, {pipeline_mode = #tpu.pipeline_mode<synchronous>, transform_indices = @transform_1, window_bounds = array<i64: 32, 64>}, {pipeline_mode = #tpu.pipeline_mode<synchronous>, transform_indices = @transform_2, window_bounds = array<i64: 1, 64>}, {pipeline_mode = #tpu.pipeline_mode<synchronous>, transform_indices = @transform_3, window_bounds = array<i64: 8, 64>}, {pipeline_mode = #tpu.pipeline_mode<synchronous>, transform_indices = @transform_4, window_bounds = array<i64: 8, 1>}, {transform_indices = @transform_5, window_bounds = array<i64: 8, 128>}]} {
    %c0 = arith.constant 0 : index
    %c0_0 = arith.constant 0 : index
    %0 = vector.load %arg1[%c0, %c0_0] : memref<128x32xf32, #tpu.memory_space<vmem>>, vector<128x32xf32>
    %c0_1 = arith.constant 0 : index
    %c0_2 = arith.constant 0 : index
    %1 = vector.load %arg2[%c0_1, %c0_2] : memref<32x64xf32, #tpu.memory_space<vmem>>, vector<32x64xf32>
    %cst = arith.constant dense<0.000000e+00> : vector<128x64xf32>
    %2 = tpu.matmul %0, %1, %cst {dimension_numbers = #tpu.dot_dimension_numbers<[1], [0], [0], [1], [0, 0, 1, 1], [], []>} : vector<128x32xf32>, vector<32x64xf32>, vector<128x64xf32> -> vector<128x64xf32>
    %c0_3 = arith.constant 0 : index
    %c0_4 = arith.constant 0 : index
    %3 = vector.load %arg3[%c0_3, %c0_4] : memref<1x64xf32, #tpu.memory_space<vmem>>, vector<1x64xf32>
    %4 = vector.broadcast %3 : vector<1x64xf32> to vector<128x64xf32>
    %5 = arith.addf %2, %4 : vector<128x64xf32>
    %cst_5 = arith.constant 0.000000e+00 : f32
    %6 = vector.broadcast %cst_5 : f32 to vector<128x64xf32>
    %7 = arith.maximumf %5, %6 : vector<128x64xf32>
    %c0_6 = arith.constant 0 : index
    %c0_7 = arith.constant 0 : index
    %8 = vector.load %arg4[%c0_6, %c0_7] : memref<8x64xf32, #tpu.memory_space<vmem>>, vector<8x64xf32>
    %cst_8 = arith.constant dense<0.000000e+00> : vector<8x128xf32>
    %9 = tpu.matmul %8, %7, %cst_8 {dimension_numbers = #tpu.dot_dimension_numbers<[1], [1], [0], [0], [0, 0, 1, 0], [], []>} : vector<8x64xf32>, vector<128x64xf32>, vector<8x128xf32> -> vector<8x128xf32>
    %c0_9 = arith.constant 0 : index
    %c0_10 = arith.constant 0 : index
    %10 = vector.load %arg5[%c0_9, %c0_10] : memref<8x1xf32, #tpu.memory_space<vmem>>, vector<8x1xf32>
    %11 = vector.broadcast %10 : vector<8x1xf32> to vector<8x128xf32>
    %12 = arith.addf %9, %11 : vector<8x128xf32>
    %c0_11 = arith.constant 0 : index
    %c0_12 = arith.constant 0 : index
    %13 = vector.load %arg6[%c0_11, %c0_12] : memref<8x128xf32, #tpu.memory_space<vmem>>, vector<8x128xf32>
    tpu.vector_store %arg6[%c0_11, %c0_12], %12 {strides = array<i32>} : memref<8x128xf32, #tpu.memory_space<vmem>>, vector<8x128xf32>,
    return
  }
  func.func @transform_0(%arg0: i32) -> (i32, i32) {
    %c0_i32 = arith.constant 0 : i32
    %c0_i32_0 = arith.constant 0 : i32
    return %arg0, %c0_i32 : i32, i32
  }
  func.func @transform_1(%arg0: i32) -> (i32, i32) {
    %c0_i32 = arith.constant 0 : i32
    %c0_i32_0 = arith.constant 0 : i32
    %c0_i32_1 = arith.constant 0 : i32
    return %c0_i32, %c0_i32_0 : i32, i32
  }
  func.func @transform_2(%arg0: i32) -> (i32, i32) {
    %c0_i32 = arith.constant 0 : i32
    %c0_i32_0 = arith.constant 0 : i32
    %c0_i32_1 = arith.constant 0 : i32
    return %c0_i32, %c0_i32_0 : i32, i32
  }
  func.func @transform_3(%arg0: i32) -> (i32, i32) {
    %c0_i32 = arith.constant 0 : i32
    %c0_i32_0 = arith.constant 0 : i32
    %c0_i32_1 = arith.constant 0 : i32
    return %c0_i32, %c0_i32_0 : i32, i32
  }
  func.func @transform_4(%arg0: i32) -> (i32, i32) {
    %c0_i32 = arith.constant 0 : i32
    %c0_i32_0 = arith.constant 0 : i32
    %c0_i32_1 = arith.constant 0 : i32
    return %c0_i32, %c0_i32_0 : i32, i32
  }
  func.func @transform_5(%arg0: i32) -> (i32, i32) {
    %c0_i32 = arith.constant 0 : i32
    %c0_i32_0 = arith.constant 0 : i32
    return %c0_i32, %arg0 : i32, i32
  }
}

</mosaic_0001>

<llo_original>
// kernel: tpu_custom_call.1
$region0: #{tpu_custom_call.1}
  #allocation0 [shape = 'u32[]', space=smem, size = 0x4, offset = 0x4, fixed_abs, tag = 'smem constant byte address 0x4 - core index']
  #allocation1 [shape = 'u32[144,128]{1,0:T(1,128)}', space=vmem, size = 0x12000, scoped, tag = 'internal scratch']
  %s0 = inlined_call_operand.vmem [shape: f32[128,32], index: 0, kind: input, shape index: {}]
  %s1 = inlined_call_operand.vmem [shape: f32[32,64], index: 1, kind: input, shape index: {}]
  %s2 = inlined_call_operand.vmem [shape: f32[1,64], index: 2, kind: input, shape index: {}]
  %s3 = inlined_call_operand.vmem [shape: f32[8,64], index: 3, kind: input, shape index: {}]
  %s4 = inlined_call_operand.vmem [shape: f32[8,1], index: 4, kind: input, shape index: {}]
  %s5 = inlined_call_operand.hbm [shape: f32[8,128], index: 5, kind: output, shape index: {}]
  %s6 = sld [smem:[#allocation0]]
  $region30: #{tpu_custom_call.1} parent=0
    _
  %s8 = ssub.s32 1, %s6
  %s9 = scalar_select 0, %s8, %s6
  $region1: #{tpu_custom_call.1} parent=0
    #allocation2 [shape = 'u8[4096]{0}', space=vmem, size = 0x1000, scoped, tag = 'output window, operand 0, single buffered']
    #allocation3 [shape = 's32[1]{0}', space=sflag, size = 0x4, scoped, tag = 'scoped memory for tpu_custom_call.1']
    %10 = vsyncpa [#allocation3], 0
    // Predicated region
    $region2: #{tpu_custom_call.1} parent=1 // pred_check
      _
    $region3: #{tpu_custom_call.1} parent=1 // pred_check_branch
      %12 = sbr.rel (0) target = $region5
    $region4: #{tpu_custom_call.1} parent=1 // pred_region
      _
    $region5: #{tpu_custom_call.1} parent=1 // pred_fallthru
      _
    // Predicated region
    $region6: #{tpu_custom_call.1} parent=1 // pred_check
      _
    $region7: #{tpu_custom_call.1} parent=1 // pred_check_branch
      %14 = sbr.rel (0) target = $region9
    $region8: #{tpu_custom_call.1} parent=1 // pred_region
      _
    $region9: #{tpu_custom_call.1} parent=1 // pred_fallthru
      _
    // Predicated region
    $region10: #{tpu_custom_call.1} parent=1 // pred_check
      _
    $region11: #{tpu_custom_call.1} parent=1 // pred_check_branch
      %16 = sbr.rel (0) target = $region13
    $region12: #{tpu_custom_call.1} parent=1 // pred_region
      _
    $region13: #{tpu_custom_call.1} parent=1 // pred_fallthru
      _
    // Predicated region
    $region14: #{tpu_custom_call.1} parent=1 // pred_check
      _
    $region15: #{tpu_custom_call.1} parent=1 // pred_check_branch
      %18 = sbr.rel (0) target = $region17
    $region16: #{tpu_custom_call.1} parent=1 // pred_region
      _
    $region17: #{tpu_custom_call.1} parent=1 // pred_fallthru
      _
    // Predicated region
    $region18: #{tpu_custom_call.1} parent=1 // pred_check
      _
    $region19: #{tpu_custom_call.1} parent=1 // pred_check_branch
      %20 = sbr.rel (0) target = $region21
    $region20: #{tpu_custom_call.1} parent=1 // pred_region
      _
    $region21: #{tpu_custom_call.1} parent=1 // pred_fallthru
      _
    %v21 = vld [vmem:[%s0] sm:$0xff]
    %v22 = vld [vmem:[%s0 + $0x8] sm:$0xff]
    %v23 = vld [vmem:[%s0 + $0x10] sm:$0xff]
    %v24 = vld [vmem:[%s0 + $0x18] sm:$0xff]
    %v25 = vld [vmem:[%s0 + $0x20] sm:$0xff]
    %v26 = vld [vmem:[%s0 + $0x28] sm:$0xff]
    %v27 = vld [vmem:[%s0 + $0x30] sm:$0xff]
    %v28 = vld [vmem:[%s0 + $0x38] sm:$0xff]
    %v29 = vld [vmem:[%s0 + $0x40] sm:$0xff]
    %v30 = vld [vmem:[%s0 + $0x48] sm:$0xff]
    %v31 = vld [vmem:[%s0 + $0x50] sm:$0xff]
    %v32 = vld [vmem:[%s0 + $0x58] sm:$0xff]
    %v33 = vld [vmem:[%s0 + $0x60] sm:$0xff]
    %v34 = vld [vmem:[%s0 + $0x68] sm:$0xff]
    %v35 = vld [vmem:[%s0 + $0x70] sm:$0xff]
    %v36 = vld [vmem:[%s0 + $0x78] sm:$0xff]
    %v37 = vld [vmem:[%s1] sm:$0xff]
    %v38 = vld [vmem:[%s1 + $0x8] sm:$0xff]
    %v39 = vld [vmem:[%s1 + $0x10] sm:$0xff]
    %v40 = vld [vmem:[%s1 + $0x18] sm:$0xff]
    %v41 = vld [vmem:[%s2] sm:$0x1]
    %v43 = vlaneseq
    %v44 = vshrl.u32 %v43, 7
    %v45 = vsub.s32 0, %v44
    %v46 = vrot.slane %v41, %v45
    %vm48 = vcmask 261120
    %v50 = vsel %vm48, %v21, 0
    %v53 = vsel %vm48, %v22, 0
    %v56 = vsel %vm48, %v23, 0
    %v59 = vsel %vm48, %v24, 0
    %v62 = vsel %vm48, %v25, 0
    %v65 = vsel %vm48, %v26, 0
    %v68 = vsel %vm48, %v27, 0
    %v71 = vsel %vm48, %v28, 0
    %v74 = vsel %vm48, %v29, 0
    %v77 = vsel %vm48, %v30, 0
    %v80 = vsel %vm48, %v31, 0
    %v83 = vsel %vm48, %v32, 0
    %v86 = vsel %vm48, %v33, 0
    %v89 = vsel %vm48, %v34, 0
    %v92 = vsel %vm48, %v35, 0
    %v95 = vsel %vm48, %v36, 0
    %97 = vmatprep.subr.mxu0 0.0
    %98 = vmatpush1.msra.mxu0 %v37
    %99 = vmatprep.subr.mxu0 0.0
    %100 = vmatpush1.msra.mxu0 %v38
    %101 = vmatprep.subr.mxu0 0.0
    %102 = vmatpush1.msra.mxu0 %v39
    %103 = vmatprep.subr.mxu0 0.0
    %104 = vmatpush1.msra.mxu0 %v40
    %105 = vmatprep.subr.mxu0 0.0
    %106 = vmatpush1.msra.mxu0 0.0
    %107 = vmatprep.subr.mxu0 0.0
    %108 = vmatpush1.msra.mxu0 0.0
    %109 = vmatprep.subr.mxu0 0.0
    %110 = vmatpush1.msra.mxu0 0.0
    %111 = vmatprep.subr.mxu0 0.0
    %112 = vmatpush1.msra.mxu0 0.0
    %113 = vmatprep.subr.mxu0 0.0
    %114 = vmatpush1.msra.mxu0 0.0
    %115 = vmatprep.subr.mxu0 0.0
    %116 = vmatpush1.msra.mxu0 0.0
    %117 = vmatprep.subr.mxu0 0.0
    %118 = vmatpush1.msra.mxu0 0.0
    %119 = vmatprep.subr.mxu0 0.0
    %120 = vmatpush1.msra.mxu0 0.0
    %121 = vmatprep.subr.mxu0 0.0
    %122 = vmatpush1.msra.mxu0 0.0
    %123 = vmatprep.subr.mxu0 0.0
    %124 = vmatpush1.msra.mxu0 0.0
    %125 = vmatprep.subr.mxu0 0.0
    %126 = vmatpush1.msra.mxu0 0.0
    %127 = vmatprep.subr.mxu0 0.0
    %128 = vmatpush1.msra.mxu0 0.0
    %129 = vmatprep.subr.mxu0 0.0
    %130 = vmatpush1.msra.mxu0 0.0
    %131 = vmatprep.subr.mxu0 0.0
    %132 = vmatpush1.msra.mxu0 0.0
    %133 = vmatprep.subr.mxu0 0.0
    %134 = vmatpush1.msra.mxu0 0.0
    %135 = vmatprep.subr.mxu0 0.0
    %136 = vmatpush1.msra.mxu0 0.0
    %137 = vmatprep.subr.mxu0 0.0
    %138 = vmatpush1.msra.mxu0 0.0
    %139 = vmatprep.subr.mxu0 0.0
    %140 = vmatpush1.msra.mxu0 0.0
    %141 = vmatprep.subr.mxu0 0.0
    %142 = vmatpush1.msra.mxu0 0.0
    %143 = vmatprep.subr.mxu0 0.0
    %144 = vmatpush1.msra.mxu0 0.0
    %145 = vmatprep.subr.mxu0 0.0
    %146 = vmatpush1.msra.mxu0 0.0
    %147 = vmatprep.subr.mxu0 0.0
    %148 = vmatpush1.msra.mxu0 0.0
    %149 = vmatprep.subr.mxu0 0.0
    %150 = vmatpush1.msra.mxu0 0.0
    %151 = vmatprep.subr.mxu0 0.0
    %152 = vmatpush1.msra.mxu0 0.0
    %153 = vmatprep.subr.mxu0 0.0
    %154 = vmatpush1.msra.mxu0 0.0
    %155 = vmatprep.subr.mxu0 0.0
    %156 = vmatpush1.msra.mxu0 0.0
    %157 = vmatprep.subr.mxu0 0.0
    %158 = vmatpush1.msra.mxu0 0.0
    %159 = vmatprep.subr.mxu0 0.0
    %160 = vmatpush1.msra.mxu0 0.0
    %161 = vmatprep.mubr.f32.mxu0 0.0
    %162 = vmatmul.mubr.f32.gmra.mrb[0].mxu0 %v50
    %v163 = vpop.f32.mrb[0].mxu0
    %v164 = vadd.f32 %v46, %v163
    %v165 = vpop.f32.mrb[0].mxu0
    %166 = vmatprep.mubr.f32.mxu0 0.0
    %167 = vmatmul.mubr.f32.gmra.mrb[0].mxu0 %v53
    %v168 = vpop.f32.mrb[0].mxu0
    %v169 = vadd.f32 %v46, %v168
    %v170 = vpop.f32.mrb[0].mxu0
    %171 = vmatprep.mubr.f32.mxu0 0.0
    %172 = vmatmul.mubr.f32.gmra.mrb[0].mxu0 %v56
    %v173 = vpop.f32.mrb[0].mxu0
    %v174 = vadd.f32 %v46, %v173
    %v175 = vpop.f32.mrb[0].mxu0
    %176 = vmatprep.mubr.f32.mxu0 0.0
    %177 = vmatmul.mubr.f32.gmra.mrb[0].mxu0 %v59
    %v178 = vpop.f32.mrb[0].mxu0
    %v179 = vadd.f32 %v46, %v178
    %v180 = vpop.f32.mrb[0].mxu0
    %181 = vmatprep.mubr.f32.mxu0 0.0
    %182 = vmatmul.mubr.f32.gmra.mrb[0].mxu0 %v62
    %v183 = vpop.f32.mrb[0].mxu0
    %v184 = vadd.f32 %v46, %v183
    %v185 = vpop.f32.mrb[0].mxu0
    %186 = vmatprep.mubr.f32.mxu0 0.0
    %187 = vmatmul.mubr.f32.gmra.mrb[0].mxu0 %v65
    %v188 = vpop.f32.mrb[0].mxu0
    %v189 = vadd.f32 %v46, %v188
    %v190 = vpop.f32.mrb[0].mxu0
    %191 = vmatprep.mubr.f32.mxu0 0.0
    %192 = vmatmul.mubr.f32.gmra.mrb[0].mxu0 %v68
    %v193 = vpop.f32.mrb[0].mxu0
    %v194 = vadd.f32 %v46, %v193
    %v195 = vpop.f32.mrb[0].mxu0
    %196 = vmatprep.mubr.f32.mxu0 0.0
    %197 = vmatmul.mubr.f32.gmra.mrb[0].mxu0 %v71
    %v198 = vpop.f32.mrb[0].mxu0
    %v199 = vadd.f32 %v46, %v198
    %v200 = vpop.f32.mrb[0].mxu0
    %201 = vmatprep.mubr.f32.mxu0 0.0
    %202 = vmatmul.mubr.f32.gmra.mrb[0].mxu0 %v74
    %v203 = vpop.f32.mrb[0].mxu0
    %v204 = vadd.f32 %v46, %v203
    %v205 = vpop.f32.mrb[0].mxu0
    %206 = vmatprep.mubr.f32.mxu0 0.0
    %207 = vmatmul.mubr.f32.gmra.mrb[0].mxu0 %v77
    %v208 = vpop.f32.mrb[0].mxu0
    %v209 = vadd.f32 %v46, %v208
    %v210 = vpop.f32.mrb[0].mxu0
    %211 = vmatprep.mubr.f32.mxu0 0.0
    %212 = vmatmul.mubr.f32.gmra.mrb[0].mxu0 %v80
    %v213 = vpop.f32.mrb[0].mxu0
    %v214 = vadd.f32 %v46, %v213
    %v215 = vpop.f32.mrb[0].mxu0
    %216 = vmatprep.mubr.f32.mxu0 0.0
    %217 = vmatmul.mubr.f32.gmra.mrb[0].mxu0 %v83
    %v218 = vpop.f32.mrb[0].mxu0
    %v219 = vadd.f32 %v46, %v218
    %v220 = vpop.f32.mrb[0].mxu0
    %221 = vmatprep.mubr.f32.mxu0 0.0
    %222 = vmatmul.mubr.f32.gmra.mrb[0].mxu0 %v86
    %v223 = vpop.f32.mrb[0].mxu0
    %v224 = vadd.f32 %v46, %v223
    %v225 = vpop.f32.mrb[0].mxu0
    %226 = vmatprep.mubr.f32.mxu0 0.0
    %227 = vmatmul.mubr.f32.gmra.mrb[0].mxu0 %v89
    %v228 = vpop.f32.mrb[0].mxu0
    %v229 = vadd.f32 %v46, %v228
    %v230 = vpop.f32.mrb[0].mxu0
    %231 = vmatprep.mubr.f32.mxu0 0.0
    %232 = vmatmul.mubr.f32.gmra.mrb[0].mxu0 %v92
    %v233 = vpop.f32.mrb[0].mxu0
    %v234 = vadd.f32 %v46, %v233
    %v235 = vpop.f32.mrb[0].mxu0
    %236 = vmatprep.mubr.f32.mxu0 0.0
    %237 = vmatmul.mubr.f32.gmra.mrb[0].mxu0 %v95
    %v238 = vpop.f32.mrb[0].mxu0
    %v239 = vadd.f32 %v46, %v238
    %v240 = vpop.f32.mrb[0].mxu0
    %241 = vdwg.mxu0
    %v242 = vmax.f32 %v164, 0.0
    %v243 = vmax.f32 %v169, 0.0
    %v244 = vmax.f32 %v174, 0.0
    %v245 = vmax.f32 %v179, 0.0
    %v246 = vmax.f32 %v184, 0.0
    %v247 = vmax.f32 %v189, 0.0
    %v248 = vmax.f32 %v194, 0.0
    %v249 = vmax.f32 %v199, 0.0
    %v250 = vmax.f32 %v204, 0.0
    %v251 = vmax.f32 %v209, 0.0
    %v252 = vmax.f32 %v214, 0.0
    %v253 = vmax.f32 %v219, 0.0
    %v254 = vmax.f32 %v224, 0.0
    %v255 = vmax.f32 %v229, 0.0
    %v256 = vmax.f32 %v234, 0.0
    %v257 = vmax.f32 %v239, 0.0
    %v258 = vld [vmem:[%s3] sm:$0xff]
    %v259 = vld [vmem:[%s4] sm:$0xff]
    %261 = vset.pattern.permute.xlu0 0
    %262 = vperm.xlu0 %261, %v259
    %v263 = vpop.permute.xlu0 %262
    %vm265 = vcmask 523264
    %v267 = vsel %vm265, %v258, 0
    %v270 = vsel %vm265, %v242, 0
    %v273 = vsel %vm265, %v243, 0
    %v276 = vsel %vm265, %v244, 0
    %v279 = vsel %vm265, %v245, 0
    %v282 = vsel %vm265, %v246, 0
    %v285 = vsel %vm265, %v247, 0
    %v288 = vsel %vm265, %v248, 0
    %v291 = vsel %vm265, %v249, 0
    %v294 = vsel %vm265, %v250, 0
    %v297 = vsel %vm265, %v251, 0
    %v300 = vsel %vm265, %v252, 0
    %v303 = vsel %vm265, %v253, 0
    %v306 = vsel %vm265, %v254, 0
    %v309 = vsel %vm265, %v255, 0
    %v312 = vsel %vm265, %v256, 0
    %v315 = vsel %vm265, %v257, 0
    %317 = vmatprep.subr.mxu0 0.0
    %318 = vmatpush1.xpose.msra.mxu0 %v270
    %319 = vmatprep.subr.mxu0 0.0
    %320 = vmatpush1.xpose.msra.mxu0 %v273
    %321 = vmatprep.subr.mxu0 0.0
    %322 = vmatpush1.xpose.msra.mxu0 %v276
    %323 = vmatprep.subr.mxu0 0.0
    %324 = vmatpush1.xpose.msra.mxu0 %v279
    %325 = vmatprep.subr.mxu0 0.0
    %326 = vmatpush1.xpose.msra.mxu0 %v282
    %327 = vmatprep.subr.mxu0 0.0
    %328 = vmatpush1.xpose.msra.mxu0 %v285
    %329 = vmatprep.subr.mxu0 0.0
    %330 = vmatpush1.xpose.msra.mxu0 %v288
    %331 = vmatprep.subr.mxu0 0.0
    %332 = vmatpush1.xpose.msra.mxu0 %v291
    %333 = vmatprep.subr.mxu0 0.0
    %334 = vmatpush1.xpose.msra.mxu0 %v294
    %335 = vmatprep.subr.mxu0 0.0
    %336 = vmatpush1.xpose.msra.mxu0 %v297
    %337 = vmatprep.subr.mxu0 0.0
    %338 = vmatpush1.xpose.msra.mxu0 %v300
    %339 = vmatprep.subr.mxu0 0.0
    %340 = vmatpush1.xpose.msra.mxu0 %v303
    %341 = vmatprep.subr.mxu0 0.0
    %342 = vmatpush1.xpose.msra.mxu0 %v306
    %343 = vmatprep.subr.mxu0 0.0
    %344 = vmatpush1.xpose.msra.mxu0 %v309
    %345 = vmatprep.subr.mxu0 0.0
    %346 = vmatpush1.xpose.msra.mxu0 %v312
    %347 = vmatprep.subr.mxu0 0.0
    %348 = vmatpush1.xpose.msra.mxu0 %v315
    %349 = vmatprep.subr.mxu0 0.0
    %350 = vmatpush1.xpose.msra.mxu0 0.0
    %351 = vmatprep.subr.mxu0 0.0
    %352 = vmatpush1.xpose.msra.mxu0 0.0
    %353 = vmatprep.subr.mxu0 0.0
    %354 = vmatpush1.xpose.msra.mxu0 0.0
    %355 = vmatprep.subr.mxu0 0.0
    %356 = vmatpush1.xpose.msra.mxu0 0.0
    %357 = vmatprep.subr.mxu0 0.0
    %358 = vmatpush1.xpose.msra.mxu0 0.0
    %359 = vmatprep.subr.mxu0 0.0
    %360 = vmatpush1.xpose.msra.mxu0 0.0
    %361 = vmatprep.subr.mxu0 0.0
    %362 = vmatpush1.xpose.msra.mxu0 0.0
    %363 = vmatprep.subr.mxu0 0.0
    %364 = vmatpush1.xpose.msra.mxu0 0.0
    %365 = vmatprep.subr.mxu0 0.0
    %366 = vmatpush1.xpose.msra.mxu0 0.0
    %367 = vmatprep.subr.mxu0 0.0
    %368 = vmatpush1.xpose.msra.mxu0 0.0
    %369 = vmatprep.subr.mxu0 0.0
    %370 = vmatpush1.xpose.msra.mxu0 0.0
    %371 = vmatprep.subr.mxu0 0.0
    %372 = vmatpush1.xpose.msra.mxu0 0.0
    %373 = vmatprep.subr.mxu0 0.0
    %374 = vmatpush1.xpose.msra.mxu0 0.0
    %375 = vmatprep.subr.mxu0 0.0
    %376 = vmatpush1.xpose.msra.mxu0 0.0
    %377 = vmatprep.subr.mxu0 0.0
    %378 = vmatpush1.xpose.msra.mxu0 0.0
    %379 = vmatprep.subr.mxu0 0.0
    %380 = vmatpush1.xpose.msra.mxu0 0.0
    %381 = vmatprep.mubr.f32.mxu0 0.0
    %382 = vmatmul.mubr.f32.gmra.mrb[0].mxu0 %v267
    %v383 = vpop.f32.mrb[0].mxu0
    %v384 = vadd.f32 %v263, %v383
    %v385 = vpop.f32.mrb[0].mxu0
    %386 = vdwg.mxu0
    %387 = vst [vmem:[#allocation2] sm:$0xff] %v384
    // Predicated region
    $region22: #{tpu_custom_call.1} parent=1 // pred_check
      _
    $region23: #{tpu_custom_call.1} parent=1 // pred_check_branch
      %389 = sbr.rel (0) target = $region25
    $region24: #{tpu_custom_call.1} parent=1 // pred_region
      %s391 = ssub.s32 128, 128
      %392 = vsyncadd [#allocation3], %s391
      %s394 = sshll.u32 [#allocation2], 4
      %s395 = int_to_ptr.vmem [resolvable:$true] %s394
      %397 = dma.vmem_to_hbm [thread:$0]  %s395, 128, %s5, [#allocation3]
    $region25: #{tpu_custom_call.1} parent=1 // pred_fallthru
      _
    // Predicated region
    $region26: #{tpu_custom_call.1} parent=1 // pred_check
      _
    $region27: #{tpu_custom_call.1} parent=1 // pred_check_branch
      %399 = sbr.rel (0) target = $region29
    $region28: #{tpu_custom_call.1} parent=1 // pred_region
      %400 = dma.done [#allocation3], 128
    $region29: #{tpu_custom_call.1} parent=1 // pred_fallthru
      _
    %401 = vsyncpa [#allocation3], 1

</llo_original>
